<compile_context>
chip_gen: v7x
topology: tpu7x:2x2x1
jax: 0.10.0
libtpu: 0.0.40
codegen_flags: <defaults>
</compile_context>

<pallas_src>
import math

import jax
import jax.numpy as jnp
from jax.experimental import pallas as pl
from jax.experimental.pallas import tpu as pltpu


def actor_kernel(xT_ref, w1_ref, b1_ref, w2_ref, b2_ref, outT_ref):
    # x^T: (S, TB); W1: (H, S); W2: (A, H) -- everything lane-dense along TB.
    xT = xT_ref[...]
    hT = jnp.dot(w1_ref[...], xT, preferred_element_type=jnp.float32) + b1_ref[...]
    hT = jnp.maximum(hT, 0.0)
    logitsT = (jnp.dot(w2_ref[...], hT, preferred_element_type=jnp.float32)
               + b2_ref[...])                              # (A, TB)
    # Numerically-stable softmax along the sublane (action) axis.
    m = jnp.max(logitsT, axis=0, keepdims=True)            # (1, TB)
    e = jnp.exp(logitsT - m)
    denom = jnp.sum(e, axis=0, keepdims=True)
    # Exact divide (not approx reciprocal): rows must sum to 1 for RL losses.
    outT_ref[...] = (e / denom).astype(outT_ref.dtype)


def actor_forward(state, w1, b1, w2, b2, *, block_b=2048):
    """state: [B, S]; w1: [H, S]; b1: [H]; w2: [A, H]; b2: [A] -> policy [B, A].

    Weights use the PyTorch nn.Linear layout ([out_features, in_features]).
    """
    B, S = state.shape
    H = w1.shape[0]
    A = w2.shape[0]

    # Batch-on-lanes: transpose activations so the batch lives on the 128-lane
    # axis. Wrapper-side transposes are layout plumbing on tiny (S / A)-row
    # slabs, not compute.
    xT = state.T.astype(jnp.float32)                        # (S, B)

    # Fixed lane tile: multiple of 128 (lane constraint); capped at B // 2 for
    # >= 2 grid steps (v7x two-TC sharding). Small batches use one full block.
    if B <= max(block_b, 128):
        TB = B
    else:
        TB = max(128, (min(block_b, B // 2) // 128) * 128)
    num_blocks = pl.cdiv(B, TB)
    B_pad = num_blocks * TB
    if B_pad != B:
        # Zero-padded lanes flow through relu/softmax harmlessly (finite) and
        # are sliced away below.
        xT = jnp.pad(xT, ((0, 0), (0, B_pad - B)))

    b1_col = b1.reshape(H, 1).astype(jnp.float32)
    b2_col = b2.reshape(A, 1).astype(jnp.float32)

    resident = lambda shape: pl.BlockSpec(shape, lambda i: (0, 0))

    outT = pl.pallas_call(
        actor_kernel,
        out_shape=jax.ShapeDtypeStruct((A, B_pad), jnp.float32),
        grid=(num_blocks,),
        in_specs=[
            pl.BlockSpec((S, TB), lambda i: (0, i)),   # pipelined activations
            resident((H, S)),                          # weights stay VMEM-resident
            resident((H, 1)),
            resident((A, H)),
            resident((A, 1)),
        ],
        out_specs=pl.BlockSpec((A, TB), lambda i: (0, i)),   # lane-dense stores
        compiler_params=pltpu.CompilerParams(
            dimension_semantics=("parallel",),         # shard batch across TCs on v7x
        ),
    )(xT, w1.astype(jnp.float32), b1_col, w2.astype(jnp.float32), b2_col)

    return outT[:, :B].T                               # back to [B, A]


def xavier_normal(key, fan_out, fan_in, gain=1.0):
    std = gain * math.sqrt(2.0 / (fan_in + fan_out))
    # PyTorch nn.Linear weight layout: [out_features, in_features].
    return std * jax.random.normal(key, (fan_out, fan_in), dtype=jnp.float32)


if __name__ == "__main__":
    # Small shapes consistent with the module: state_dim=4, hidden=16, action_dim=2.
    batch, state_dim, hidden, action_dim = 32, 4, 16, 2

    key = jax.random.PRNGKey(0)
    k_x, k_w1, k_w2 = jax.random.split(key, 3)

    state = jax.random.normal(k_x, (batch, state_dim), dtype=jnp.float32)
    w1 = xavier_normal(k_w1, hidden, state_dim)
    b1 = jnp.zeros((hidden,), dtype=jnp.float32)
    w2 = xavier_normal(k_w2, action_dim, hidden)
    b2 = jnp.zeros((action_dim,), dtype=jnp.float32)

    def reference(x):
        h = jnp.maximum(x @ w1.T + b1, 0.0)
        return jax.nn.softmax(h @ w2.T + b2, axis=-1)

    # Tolerance accounts for MXU bf16-pass rounding differences vs. the XLA
    # reference matmul at default precision; probabilities live in [0, 1].
    tol = 5e-3

    # 1) Single-block path (B <= tile).
    policy = actor_forward(state, w1, b1, w2, b2)
    jax.block_until_ready(policy)
    assert policy.shape == (batch, action_dim)
    assert jnp.allclose(policy, reference(state), atol=tol), "mismatch vs reference"
    assert jnp.allclose(jnp.sum(policy, axis=-1), 1.0, atol=1e-4)

    # 2) Multi-step grid with a padded partial block (exercises the pipelined
    #    path + wrapper-side padding at a still-small size).
    batch2 = 300
    state2 = jax.random.normal(jax.random.PRNGKey(1), (batch2, state_dim),
                               dtype=jnp.float32)
    policy2 = actor_forward(state2, w1, b1, w2, b2, block_b=128)
    jax.block_until_ready(policy2)
    assert policy2.shape == (batch2, action_dim)
    assert jnp.allclose(policy2, reference(state2), atol=tol), "mismatch (padded path)"
    assert jnp.allclose(jnp.sum(policy2, axis=-1), 1.0, atol=1e-4)

    print("KERNEL_OK")
</pallas_src>

<mosaic_0001>
module attributes {stable_mosaic.version = 11 : i64} {
  func.func @actor_kernel(%arg0: i32, %arg1: memref<4x32xf32, #tpu.memory_space<vmem>>, %arg2: memref<16x4xf32, #tpu.memory_space<vmem>>, %arg3: memref<16x1xf32, #tpu.memory_space<vmem>>, %arg4: memref<2x16xf32, #tpu.memory_space<vmem>>, %arg5: memref<2x1xf32, #tpu.memory_space<vmem>>, %arg6: memref<2x32xf32, #tpu.memory_space<vmem>>) attributes {dimension_semantics = [#tpu.dimension_semantics<parallel>], iteration_bounds = array<i64: 1>, scalar_prefetch = 0 : i64, scratch_operands = 0 : i64, tpu.core_type = #tpu.core_type<tc>, window_params = [{transform_indices = @transform_0, window_bounds = array<i64: 4, 32>}, {pipeline_mode = #tpu.pipeline_mode<synchronous>, transform_indices = @transform_1, window_bounds = array<i64: 16, 4>}, {pipeline_mode = #tpu.pipeline_mode<synchronous>, transform_indices = @transform_2, window_bounds = array<i64: 16, 1>}, {pipeline_mode = #tpu.pipeline_mode<synchronous>, transform_indices = @transform_3, window_bounds = array<i64: 2, 16>}, {pipeline_mode = #tpu.pipeline_mode<synchronous>, transform_indices = @transform_4, window_bounds = array<i64: 2, 1>}, {transform_indices = @transform_5, window_bounds = array<i64: 2, 32>}]} {
    %c0 = arith.constant 0 : index
    %c0_0 = arith.constant 0 : index
    %0 = vector.load %arg1[%c0, %c0_0] : memref<4x32xf32, #tpu.memory_space<vmem>>, vector<4x32xf32>
    %c0_1 = arith.constant 0 : index
    %c0_2 = arith.constant 0 : index
    %1 = vector.load %arg2[%c0_1, %c0_2] : memref<16x4xf32, #tpu.memory_space<vmem>>, vector<16x4xf32>
    %cst = arith.constant dense<0.000000e+00> : vector<16x32xf32>
    %2 = tpu.matmul %1, %0, %cst {dimension_numbers = #tpu.dot_dimension_numbers<[1], [0], [0], [1], [0, 0, 1, 1], [], []>} : vector<16x4xf32>, vector<4x32xf32>, vector<16x32xf32> -> vector<16x32xf32>
    %c0_3 = arith.constant 0 : index
    %c0_4 = arith.constant 0 : index
    %3 = vector.load %arg3[%c0_3, %c0_4] : memref<16x1xf32, #tpu.memory_space<vmem>>, vector<16x1xf32>
    %4 = vector.broadcast %3 : vector<16x1xf32> to vector<16x32xf32>
    %5 = arith.addf %2, %4 : vector<16x32xf32>
    %cst_5 = arith.constant 0.000000e+00 : f32
    %6 = vector.broadcast %cst_5 : f32 to vector<16x32xf32>
    %7 = arith.maximumf %5, %6 : vector<16x32xf32>
    %c0_6 = arith.constant 0 : index
    %c0_7 = arith.constant 0 : index
    %8 = vector.load %arg4[%c0_6, %c0_7] : memref<2x16xf32, #tpu.memory_space<vmem>>, vector<2x16xf32>
    %cst_8 = arith.constant dense<0.000000e+00> : vector<2x32xf32>
    %9 = tpu.matmul %8, %7, %cst_8 {dimension_numbers = #tpu.dot_dimension_numbers<[1], [0], [0], [1], [0, 0, 1, 1], [], []>} : vector<2x16xf32>, vector<16x32xf32>, vector<2x32xf32> -> vector<2x32xf32>
    %c0_9 = arith.constant 0 : index
    %c0_10 = arith.constant 0 : index
    %10 = vector.load %arg5[%c0_9, %c0_10] : memref<2x1xf32, #tpu.memory_space<vmem>>, vector<2x1xf32>
    %11 = vector.broadcast %10 : vector<2x1xf32> to vector<2x32xf32>
    %12 = arith.addf %9, %11 : vector<2x32xf32>
    %cst_11 = arith.constant dense<0xFF800000> : vector<32xf32>
    %13 = vector.multi_reduction <maximumf>, %12, %cst_11 [0] : vector<2x32xf32> to vector<32xf32>
    %14 = vector.shape_cast %13 : vector<32xf32> to vector<1x32xf32>
    %15 = vector.broadcast %14 : vector<1x32xf32> to vector<2x32xf32>
    %16 = arith.subf %12, %15 : vector<2x32xf32>
    %17 = math.exp %16 : vector<2x32xf32>
    %cst_12 = arith.constant dense<0.000000e+00> : vector<32xf32>
    %18 = vector.multi_reduction <add>, %17, %cst_12 [0] : vector<2x32xf32> to vector<32xf32>
    %19 = vector.shape_cast %18 : vector<32xf32> to vector<1x32xf32>
    %20 = vector.broadcast %19 : vector<1x32xf32> to vector<2x32xf32>
    %21 = arith.divf %17, %20 : vector<2x32xf32>
    %c0_13 = arith.constant 0 : index
    %c0_14 = arith.constant 0 : index
    %22 = vector.load %arg6[%c0_13, %c0_14] : memref<2x32xf32, #tpu.memory_space<vmem>>, vector<2x32xf32>
    tpu.vector_store %arg6[%c0_13, %c0_14], %21 {strides = array<i32>} : memref<2x32xf32, #tpu.memory_space<vmem>>, vector<2x32xf32>,
    return
  }
  func.func @transform_0(%arg0: i32) -> (i32, i32) {
    %c0_i32 = arith.constant 0 : i32
    %c0_i32_0 = arith.constant 0 : i32
    return %c0_i32, %arg0 : i32, i32
  }
  func.func @transform_1(%arg0: i32) -> (i32, i32) {
    %c0_i32 = arith.constant 0 : i32
    %c0_i32_0 = arith.constant 0 : i32
    %c0_i32_1 = arith.constant 0 : i32
    return %c0_i32, %c0_i32_0 : i32, i32
  }
  func.func @transform_2(%arg0: i32) -> (i32, i32) {
    %c0_i32 = arith.constant 0 : i32
    %c0_i32_0 = arith.constant 0 : i32
    %c0_i32_1 = arith.constant 0 : i32
    return %c0_i32, %c0_i32_0 : i32, i32
  }
  func.func @transform_3(%arg0: i32) -> (i32, i32) {
    %c0_i32 = arith.constant 0 : i32
    %c0_i32_0 = arith.constant 0 : i32
    %c0_i32_1 = arith.constant 0 : i32
    return %c0_i32, %c0_i32_0 : i32, i32
  }
  func.func @transform_4(%arg0: i32) -> (i32, i32) {
    %c0_i32 = arith.constant 0 : i32
    %c0_i32_0 = arith.constant 0 : i32
    %c0_i32_1 = arith.constant 0 : i32
    return %c0_i32, %c0_i32_0 : i32, i32
  }
  func.func @transform_5(%arg0: i32) -> (i32, i32) {
    %c0_i32 = arith.constant 0 : i32
    %c0_i32_0 = arith.constant 0 : i32
    return %c0_i32, %arg0 : i32, i32
  }
}

</mosaic_0001>

<llo_original>
// kernel: tpu_custom_call.1
$region0: #{tpu_custom_call.1}
  #allocation0 [shape = 'u32[]', space=smem, size = 0x4, offset = 0x4, fixed_abs, tag = 'smem constant byte address 0x4 - core index']
  #allocation1 [shape = 'u32[144,128]{1,0:T(1,128)}', space=vmem, size = 0x12000, scoped, tag = 'internal scratch']
  %s0 = inlined_call_operand.vmem [shape: f32[4,32], index: 0, kind: input, shape index: {}]
  %s1 = inlined_call_operand.vmem [shape: f32[16,4], index: 1, kind: input, shape index: {}]
  %s2 = inlined_call_operand.vmem [shape: f32[16,1], index: 2, kind: input, shape index: {}]
  %s3 = inlined_call_operand.vmem [shape: f32[2,16], index: 3, kind: input, shape index: {}]
  %s4 = inlined_call_operand.vmem [shape: f32[2,1], index: 4, kind: input, shape index: {}]
  %s5 = inlined_call_operand.hbm [shape: f32[2,32], index: 5, kind: output, shape index: {}]
  %s6 = sld [smem:[#allocation0]]
  $region30: #{tpu_custom_call.1} parent=0
    _
  %s8 = ssub.s32 1, %s6
  %s9 = scalar_select 0, %s8, %s6
  $region1: #{tpu_custom_call.1} parent=0
    #allocation2 [shape = 'u8[1024]{0}', space=vmem, size = 0x400, scoped, tag = 'output window, operand 0, single buffered']
    #allocation3 [shape = 's32[1]{0}', space=sflag, size = 0x4, scoped, tag = 'scoped memory for tpu_custom_call.1']
    %10 = vsyncpa [#allocation3], 0
    // Predicated region
    $region2: #{tpu_custom_call.1} parent=1 // pred_check
      _
    $region3: #{tpu_custom_call.1} parent=1 // pred_check_branch
      %12 = sbr.rel (0) target = $region5
    $region4: #{tpu_custom_call.1} parent=1 // pred_region
      _
    $region5: #{tpu_custom_call.1} parent=1 // pred_fallthru
      _
    // Predicated region
    $region6: #{tpu_custom_call.1} parent=1 // pred_check
      _
    $region7: #{tpu_custom_call.1} parent=1 // pred_check_branch
      %14 = sbr.rel (0) target = $region9
    $region8: #{tpu_custom_call.1} parent=1 // pred_region
      _
    $region9: #{tpu_custom_call.1} parent=1 // pred_fallthru
      _
    // Predicated region
    $region10: #{tpu_custom_call.1} parent=1 // pred_check
      _
    $region11: #{tpu_custom_call.1} parent=1 // pred_check_branch
      %16 = sbr.rel (0) target = $region13
    $region12: #{tpu_custom_call.1} parent=1 // pred_region
      _
    $region13: #{tpu_custom_call.1} parent=1 // pred_fallthru
      _
    // Predicated region
    $region14: #{tpu_custom_call.1} parent=1 // pred_check
      _
    $region15: #{tpu_custom_call.1} parent=1 // pred_check_branch
      %18 = sbr.rel (0) target = $region17
    $region16: #{tpu_custom_call.1} parent=1 // pred_region
      _
    $region17: #{tpu_custom_call.1} parent=1 // pred_fallthru
      _
    // Predicated region
    $region18: #{tpu_custom_call.1} parent=1 // pred_check
      _
    $region19: #{tpu_custom_call.1} parent=1 // pred_check_branch
      %20 = sbr.rel (0) target = $region21
    $region20: #{tpu_custom_call.1} parent=1 // pred_region
      _
    $region21: #{tpu_custom_call.1} parent=1 // pred_fallthru
      _
    %v21 = vld [vmem:[%s0] sm:$0xf]
    %v22 = vld [vmem:[%s1] sm:$0xff]
    %v23 = vld [vmem:[%s1 + $0x8] sm:$0xff]
    %v24 = vld [vmem:[%s2] sm:$0xff]
    %v25 = vld [vmem:[%s2 + $0x8] sm:$0xff]
    %27 = vset.pattern.permute.xlu0 0
    %28 = vperm.xlu0 %27, %v24
    %v29 = vpop.permute.xlu0 %28
    %32 = vset.pattern.permute.xlu0 0
    %33 = vperm.xlu0 %32, %v25
    %v34 = vpop.permute.xlu0 %33
    %vm36 = vcmask 31744
    %v38 = vsel %vm36, %v22, 0
    %v41 = vsel %vm36, %v23, 0
    %vm43 = vcmask 1043456
    %v45 = vsel %vm43, %v21, 0
    %47 = vmatprep.subr.mxu0 0.0
    %48 = vmatpush1.msra.mxu0 %v45
    %49 = vmatprep.subr.mxu0 0.0
    %50 = vmatpush1.msra.mxu0 0.0
    %51 = vmatprep.subr.mxu0 0.0
    %52 = vmatpush1.msra.mxu0 0.0
    %53 = vmatprep.subr.mxu0 0.0
    %54 = vmatpush1.msra.mxu0 0.0
    %55 = vmatprep.subr.mxu0 0.0
    %56 = vmatpush1.msra.mxu0 0.0
    %57 = vmatprep.subr.mxu0 0.0
    %58 = vmatpush1.msra.mxu0 0.0
    %59 = vmatprep.subr.mxu0 0.0
    %60 = vmatpush1.msra.mxu0 0.0
    %61 = vmatprep.subr.mxu0 0.0
    %62 = vmatpush1.msra.mxu0 0.0
    %63 = vmatprep.subr.mxu0 0.0
    %64 = vmatpush1.msra.mxu0 0.0
    %65 = vmatprep.subr.mxu0 0.0
    %66 = vmatpush1.msra.mxu0 0.0
    %67 = vmatprep.subr.mxu0 0.0
    %68 = vmatpush1.msra.mxu0 0.0
    %69 = vmatprep.subr.mxu0 0.0
    %70 = vmatpush1.msra.mxu0 0.0
    %71 = vmatprep.subr.mxu0 0.0
    %72 = vmatpush1.msra.mxu0 0.0
    %73 = vmatprep.subr.mxu0 0.0
    %74 = vmatpush1.msra.mxu0 0.0
    %75 = vmatprep.subr.mxu0 0.0
    %76 = vmatpush1.msra.mxu0 0.0
    %77 = vmatprep.subr.mxu0 0.0
    %78 = vmatpush1.msra.mxu0 0.0
    %79 = vmatprep.subr.mxu0 0.0
    %80 = vmatpush1.msra.mxu0 0.0
    %81 = vmatprep.subr.mxu0 0.0
    %82 = vmatpush1.msra.mxu0 0.0
    %83 = vmatprep.subr.mxu0 0.0
    %84 = vmatpush1.msra.mxu0 0.0
    %85 = vmatprep.subr.mxu0 0.0
    %86 = vmatpush1.msra.mxu0 0.0
    %87 = vmatprep.subr.mxu0 0.0
    %88 = vmatpush1.msra.mxu0 0.0
    %89 = vmatprep.subr.mxu0 0.0
    %90 = vmatpush1.msra.mxu0 0.0
    %91 = vmatprep.subr.mxu0 0.0
    %92 = vmatpush1.msra.mxu0 0.0
    %93 = vmatprep.subr.mxu0 0.0
    %94 = vmatpush1.msra.mxu0 0.0
    %95 = vmatprep.subr.mxu0 0.0
    %96 = vmatpush1.msra.mxu0 0.0
    %97 = vmatprep.subr.mxu0 0.0
    %98 = vmatpush1.msra.mxu0 0.0
    %99 = vmatprep.subr.mxu0 0.0
    %100 = vmatpush1.msra.mxu0 0.0
    %101 = vmatprep.subr.mxu0 0.0
    %102 = vmatpush1.msra.mxu0 0.0
    %103 = vmatprep.subr.mxu0 0.0
    %104 = vmatpush1.msra.mxu0 0.0
    %105 = vmatprep.subr.mxu0 0.0
    %106 = vmatpush1.msra.mxu0 0.0
    %107 = vmatprep.subr.mxu0 0.0
    %108 = vmatpush1.msra.mxu0 0.0
    %109 = vmatprep.subr.mxu0 0.0
    %110 = vmatpush1.msra.mxu0 0.0
    %111 = vmatprep.mubr.f32.mxu0 0.0
    %112 = vmatmul.mubr.f32.gmra.mrb[0].mxu0 %v38
    %v113 = vpop.f32.mrb[0].mxu0
    %v114 = vadd.f32 %v29, %v113
    %v115 = vpop.f32.mrb[0].mxu0
    %116 = vmatprep.mubr.f32.mxu0 0.0
    %117 = vmatmul.mubr.f32.gmra.mrb[0].mxu0 %v41
    %v118 = vpop.f32.mrb[0].mxu0
    %v119 = vadd.f32 %v34, %v118
    %v120 = vpop.f32.mrb[0].mxu0
    %121 = vdwg.mxu0
    %v122 = vmax.f32 %v114, 0.0
    %v123 = vmax.f32 %v119, 0.0
    %v124 = vld [vmem:[%s3] sm:$0x3]
    %v125 = vld [vmem:[%s4] sm:$0x3]
    %127 = vset.pattern.permute.xlu0 0
    %128 = vperm.xlu0 %127, %v125
    %v129 = vpop.permute.xlu0 %128
    %vm131 = vcmask 130048
    %v133 = vsel %vm131, %v124, 0
    %135 = vmatprep.subr.mxu0 0.0
    %136 = vmatpush1.msra.mxu0 %v122
    %137 = vmatprep.subr.mxu0 0.0
    %138 = vmatpush1.msra.mxu0 %v123
    %139 = vmatprep.subr.mxu0 0.0
    %140 = vmatpush1.msra.mxu0 0.0
    %141 = vmatprep.subr.mxu0 0.0
    %142 = vmatpush1.msra.mxu0 0.0
    %143 = vmatprep.subr.mxu0 0.0
    %144 = vmatpush1.msra.mxu0 0.0
    %145 = vmatprep.subr.mxu0 0.0
    %146 = vmatpush1.msra.mxu0 0.0
    %147 = vmatprep.subr.mxu0 0.0
    %148 = vmatpush1.msra.mxu0 0.0
    %149 = vmatprep.subr.mxu0 0.0
    %150 = vmatpush1.msra.mxu0 0.0
    %151 = vmatprep.subr.mxu0 0.0
    %152 = vmatpush1.msra.mxu0 0.0
    %153 = vmatprep.subr.mxu0 0.0
    %154 = vmatpush1.msra.mxu0 0.0
    %155 = vmatprep.subr.mxu0 0.0
    %156 = vmatpush1.msra.mxu0 0.0
    %157 = vmatprep.subr.mxu0 0.0
    %158 = vmatpush1.msra.mxu0 0.0
    %159 = vmatprep.subr.mxu0 0.0
    %160 = vmatpush1.msra.mxu0 0.0
    %161 = vmatprep.subr.mxu0 0.0
    %162 = vmatpush1.msra.mxu0 0.0
    %163 = vmatprep.subr.mxu0 0.0
    %164 = vmatpush1.msra.mxu0 0.0
    %165 = vmatprep.subr.mxu0 0.0
    %166 = vmatpush1.msra.mxu0 0.0
    %167 = vmatprep.subr.mxu0 0.0
    %168 = vmatpush1.msra.mxu0 0.0
    %169 = vmatprep.subr.mxu0 0.0
    %170 = vmatpush1.msra.mxu0 0.0
    %171 = vmatprep.subr.mxu0 0.0
    %172 = vmatpush1.msra.mxu0 0.0
    %173 = vmatprep.subr.mxu0 0.0
    %174 = vmatpush1.msra.mxu0 0.0
    %175 = vmatprep.subr.mxu0 0.0
    %176 = vmatpush1.msra.mxu0 0.0
    %177 = vmatprep.subr.mxu0 0.0
    %178 = vmatpush1.msra.mxu0 0.0
    %179 = vmatprep.subr.mxu0 0.0
    %180 = vmatpush1.msra.mxu0 0.0
    %181 = vmatprep.subr.mxu0 0.0
    %182 = vmatpush1.msra.mxu0 0.0
    %183 = vmatprep.subr.mxu0 0.0
    %184 = vmatpush1.msra.mxu0 0.0
    %185 = vmatprep.subr.mxu0 0.0
    %186 = vmatpush1.msra.mxu0 0.0
    %187 = vmatprep.subr.mxu0 0.0
    %188 = vmatpush1.msra.mxu0 0.0
    %189 = vmatprep.subr.mxu0 0.0
    %190 = vmatpush1.msra.mxu0 0.0
    %191 = vmatprep.subr.mxu0 0.0
    %192 = vmatpush1.msra.mxu0 0.0
    %193 = vmatprep.subr.mxu0 0.0
    %194 = vmatpush1.msra.mxu0 0.0
    %195 = vmatprep.subr.mxu0 0.0
    %196 = vmatpush1.msra.mxu0 0.0
    %197 = vmatprep.subr.mxu0 0.0
    %198 = vmatpush1.msra.mxu0 0.0
    %199 = vmatprep.mubr.f32.mxu0 0.0
    %200 = vmatmul.mubr.f32.gmra.mrb[0].mxu0 %v133
    %v201 = vpop.f32.mrb[0].mxu0
    %v202 = vadd.f32 %v129, %v201
    %v203 = vpop.f32.mrb[0].mxu0
    %204 = vdwg.mxu0
    %vm205 = vcmask 254976
    %v206 = vsel %vm205, %v202, -inf
    %v207 = vrot.slane %v206, 4
    %v208 = vmax.f32 %v206, %v207
    %v209 = vrot.slane %v208, 2
    %v210 = vmax.f32 %v208, %v209
    %v211 = vrot.slane %v210, 1
    %v212 = vmax.f32 %v210, %v211
    %v213 = vsub.f32 %v202, %v212
    %v214 = vmul.f32 %v213, 1.442695
    %v215 = vpow.pop %v214
    %v216 = vsel %vm205, %v215, 0.0
    %v217 = vrot.slane %v216, 4
    %v218 = vadd.f32 %v216, %v217
    %v219 = vrot.slane %v218, 2
    %v220 = vadd.f32 %v218, %v219
    %v221 = vrot.slane %v220, 1
    %v222 = vadd.f32 %v220, %v221
    %v223 = vrcp.pop %v222
    %v224 = vmul.f32 %v215, %v223
    %225 = vst.msk [vmem:[#allocation2] sm:$0x3] %vm205, %v224
    // Predicated region
    $region22: #{tpu_custom_call.1} parent=1 // pred_check
      _
    $region23: #{tpu_custom_call.1} parent=1 // pred_check_branch
      %227 = sbr.rel (0) target = $region25
    $region24: #{tpu_custom_call.1} parent=1 // pred_region
      %s229 = ssub.s32 32, 32
      %230 = vsyncadd [#allocation3], %s229
      %s232 = sshll.u32 [#allocation2], 4
      %s233 = int_to_ptr.vmem [resolvable:$true] %s232
      %235 = dma.vmem_to_hbm [thread:$0]  %s233, 32, %s5, [#allocation3]
    $region25: #{tpu_custom_call.1} parent=1 // pred_fallthru
      _
    // Predicated region
    $region26: #{tpu_custom_call.1} parent=1 // pred_check
      _
    $region27: #{tpu_custom_call.1} parent=1 // pred_check_branch
      %237 = sbr.rel (0) target = $region29
    $region28: #{tpu_custom_call.1} parent=1 // pred_region
      %238 = dma.done [#allocation3], 32
    $region29: #{tpu_custom_call.1} parent=1 // pred_fallthru
      _
    %239 = vsyncpa [#allocation3], 1

</llo_original>
